<compile_context>
chip_gen: v7x
topology: tpu7x:2x2x1
jax: 0.10.0
libtpu: 0.0.40
codegen_flags: <defaults>
</compile_context>

<pallas_src>
import jax
import jax.numpy as jnp
from jax.experimental import pallas as pl
from jax.experimental.pallas import tpu as pltpu


_TARGET_TILE_BYTES = 2 * 1024 * 1024    # ~2 MiB per pipelined buffer
_VMEM_LIMIT_BYTES = 32 * 1024 * 1024    # safe on v5e (128 MiB), v6e (128), v7x (64)


def _film_rows_kernel(s_ref, t_ref, x_ref, o_ref):
    """FiLM affine with per-batch scale/shift broadcast over rows.

    s_ref, t_ref : (1, 1, W) f32   scale (with +1 already folded in) / shift
    x_ref, o_ref : (1, tile_n, W)  input / output tile (x dtype)
    """
    x = x_ref[0].astype(jnp.float32)                       # (tile_n, W)
    o_ref[0] = (x * s_ref[0] + t_ref[0]).astype(o_ref.dtype)


def _film_elem_kernel(s_ref, t_ref, x_ref, o_ref):
    """Pure elementwise FiLM (scale/shift blocks have the same shape as x)."""
    x = x_ref[...].astype(jnp.float32)
    o_ref[...] = (x * s_ref[...] + t_ref[...]).astype(o_ref.dtype)


def _pick_row_tile(rows, width, itemsize, target_bytes=_TARGET_TILE_BYTES):
    """Largest 8-multiple row tile (<= rows) whose slab is ~target_bytes."""
    if rows <= 8:
        return rows
    t = max(8, int(target_bytes) // max(1, width * itemsize))
    t = (t // 8) * 8
    rows8 = (rows // 8) * 8
    return max(8, min(t, rows8))


def _film_reference(x, cond, weight, bias):
    """Pure-JAX reference mirroring the PyTorch forward (also XLA fallback)."""
    mod = (cond.astype(jnp.float32) @ weight.astype(jnp.float32)
           + bias.astype(jnp.float32))                       # (B, 2*dim)
    dim = x.shape[-1]
    scale, shift = mod[:, :dim], mod[:, dim:]
    bshape = (x.shape[0],) + (1,) * (x.ndim - 2) + (dim,)
    return (x.astype(jnp.float32) * (scale.reshape(bshape) + 1.0)
            + shift.reshape(bshape)).astype(x.dtype)


class Film:
    """JAX/Pallas port of the PyTorch `Film` module (FiLM conditioning)."""

    def __init__(self, cond_dim: int, dim: int, *, key, dtype=jnp.float32):
        self.cond_dim = cond_dim
        self.dim = dim
        k_w, k_b = jax.random.split(key)
        bound = 1.0 / (cond_dim ** 0.5)
        # PyTorch nn.Linear stores (2*dim, cond_dim); we keep the transposed
        # (cond_dim, 2*dim) layout so cond @ W needs no transpose.
        self.weight = jax.random.uniform(
            k_w, (cond_dim, 2 * dim), dtype, minval=-bound, maxval=bound)
        self.bias = jax.random.uniform(
            k_b, (2 * dim,), dtype, minval=-bound, maxval=bound)

    def __call__(self, x, cond, *, xla_fallback_bytes: int = 0):
        assert cond.ndim == 2 and cond.shape[-1] == self.cond_dim
        assert x.shape[-1] == self.dim and x.shape[0] == cond.shape[0]
        B, dim = x.shape[0], self.dim

        # Micro inputs: fused XLA is already at the HBM roofline and avoids
        # fixed pallas_call cost.  (Recommended production value: 1 << 20.)
        if x.size * x.dtype.itemsize < xla_fallback_bytes:
            return _film_reference(x, cond, self.weight, self.bias)

        # Modulation stays in XLA: keeps the MXU push/pop and weight residency
        # off the kernel's critical path / VMEM budget.  '+1' folded into scale.
        mod = (cond.astype(jnp.float32) @ self.weight.astype(jnp.float32)
               + self.bias.astype(jnp.float32))              # (B, 2*dim) f32
        scale1 = mod[:, :dim] + 1.0                          # (B, dim) f32
        shift = mod[:, dim:]                                 # (B, dim) f32

        # Flatten all middle dims of x into one row axis.
        n = 1
        for s in x.shape[1:-1]:
            n *= s

        if n == 1:
            out2 = self._apply_elementwise(x.reshape(B, dim), scale1, shift)
        else:
            out2 = self._apply_rows(x.reshape(B, n, dim), scale1, shift)
        return out2.reshape(x.shape)

    # ---- 3-D+ case: per-batch scale/shift broadcast over n rows -------------
    def _apply_rows(self, x3, scale1, shift):
        B, n, dim = x3.shape
        itemsize = x3.dtype.itemsize

        # Lane-dense packing: for small dim dividing 128, view x as
        # (B, n*dim/128, 128) and tile scale/shift to 128 lanes so every store
        # is a full-lane vst instead of a masked partial store.
        packed = (dim < 128) and (128 % dim == 0) and ((n * dim) % 128 == 0)
        if packed:
            rep = 128 // dim
            width = 128
            rows = (n * dim) // 128
            xk = x3.reshape(B, rows, width)
            sk = jnp.tile(scale1, (1, rep)).reshape(B, 1, width)
            tk = jnp.tile(shift, (1, rep)).reshape(B, 1, width)
        else:
            width, rows = dim, n
            xk = x3
            sk = scale1.reshape(B, 1, width)
            tk = shift.reshape(B, 1, width)

        tile_n = _pick_row_tile(rows, width, itemsize)
        grid_n = pl.cdiv(rows, tile_n)
        # v7x megacore: guarantee >= 2 parallel grid steps when possible.
        if B * grid_n < 2 and rows > 8:
            tile_n = max(8, ((rows // 2) // 8) * 8)
            grid_n = pl.cdiv(rows, tile_n)

        out = pl.pallas_call(
            _film_rows_kernel,
            out_shape=jax.ShapeDtypeStruct((B, rows, width), x3.dtype),
            grid_spec=pltpu.PrefetchScalarGridSpec(
                num_scalar_prefetch=0,
                grid=(B, grid_n),
                in_specs=[
                    pl.BlockSpec((1, 1, width), lambda b, j: (b, 0, 0)),
                    pl.BlockSpec((1, 1, width), lambda b, j: (b, 0, 0)),
                    pl.BlockSpec((1, tile_n, width), lambda b, j: (b, j, 0)),
                ],
                out_specs=pl.BlockSpec((1, tile_n, width),
                                       lambda b, j: (b, j, 0)),
            ),
            compiler_params=pltpu.CompilerParams(
                dimension_semantics=("parallel", "parallel"),
                vmem_limit_bytes=_VMEM_LIMIT_BYTES),
        )(sk, tk, xk)
        return out.reshape(B, n, dim)

    # ---- 2-D case: scale/shift have the same shape as x -> elementwise ------
    def _apply_elementwise(self, x2, scale1, shift):
        B, dim = x2.shape
        itemsize = x2.dtype.itemsize

        packed = (dim < 128) and ((B * dim) % 128 == 0)
        if packed:
            width = 128
            rows = (B * dim) // 128
        else:
            width, rows = dim, B
        xk = x2.reshape(rows, width)
        sk = scale1.reshape(rows, width)
        tk = shift.reshape(rows, width)

        tile_r = _pick_row_tile(rows, width, itemsize)
        grid_r = pl.cdiv(rows, tile_r)
        if grid_r < 2 and rows > 8:
            tile_r = max(8, ((rows // 2) // 8) * 8)
            grid_r = pl.cdiv(rows, tile_r)

        out = pl.pallas_call(
            _film_elem_kernel,
            out_shape=jax.ShapeDtypeStruct((rows, width), x2.dtype),
            grid_spec=pltpu.PrefetchScalarGridSpec(
                num_scalar_prefetch=0,
                grid=(grid_r,),
                in_specs=[
                    pl.BlockSpec((tile_r, width), lambda i: (i, 0)),
                    pl.BlockSpec((tile_r, width), lambda i: (i, 0)),
                    pl.BlockSpec((tile_r, width), lambda i: (i, 0)),
                ],
                out_specs=pl.BlockSpec((tile_r, width), lambda i: (i, 0)),
            ),
            compiler_params=pltpu.CompilerParams(
                dimension_semantics=("parallel",),
                vmem_limit_bytes=_VMEM_LIMIT_BYTES),
        )(sk, tk, xk)
        return out.reshape(B, dim)


if __name__ == "__main__":
    key = jax.random.PRNGKey(0)

    def check(x_shape, cond_dim, dtype, subkey):
        kx, kc, kp = jax.random.split(subkey, 3)
        dim = x_shape[-1]
        x = jax.random.normal(kx, x_shape, dtype=dtype)
        cond = jax.random.normal(kc, (x_shape[0], cond_dim), dtype=jnp.float32)
        film = Film(cond_dim, dim, key=kp)
        out = jax.block_until_ready(film(x, cond))
        ref = _film_reference(x, cond, film.weight, film.bias)
        assert out.shape == x.shape, out.shape
        assert out.dtype == x.dtype, out.dtype
        tol = 1e-5 if dtype == jnp.float32 else 2e-2
        err = float(jnp.max(jnp.abs(out.astype(jnp.float32)
                                    - ref.astype(jnp.float32))))
        assert jnp.allclose(out.astype(jnp.float32), ref.astype(jnp.float32),
                            atol=tol, rtol=tol), err

    k1, k2, k3, k4 = jax.random.split(key, 4)
    # 3-D x, small dim -> lane-packed broadcast path
    check((2, 8, 32), 16, jnp.float32, k1)
    # 2-D x -> batch-blocked elementwise path (lane-packed)
    check((4, 64), 16, jnp.float32, k2)
    # 3-D x, dim neither divides nor is a multiple of 128 -> masked-store fallback
    check((2, 5, 48), 8, jnp.float32, k3)
    # bf16 activations, lane-aligned dim
    check((2, 16, 128), 16, jnp.bfloat16, k4)

    print("KERNEL_OK")
</pallas_src>

<mosaic_0001>
module attributes {stable_mosaic.version = 11 : i64} {
  func.func @_film_rows_kernel(%arg0: i32, %arg1: i32, %arg2: memref<1x1x128xf32, #tpu.memory_space<vmem>>, %arg3: memref<1x1x128xf32, #tpu.memory_space<vmem>>, %arg4: memref<1x2x128xf32, #tpu.memory_space<vmem>>, %arg5: memref<1x2x128xf32, #tpu.memory_space<vmem>>) attributes {dimension_semantics = [#tpu.dimension_semantics<parallel>, #tpu.dimension_semantics<parallel>], iteration_bounds = array<i64: 2, 1>, scalar_prefetch = 0 : i64, scratch_operands = 0 : i64, tpu.core_type = #tpu.core_type<tc>, window_params = [{transform_indices = @transform_0, window_bounds = array<i64: 1, 1, 128>}, {transform_indices = @transform_1, window_bounds = array<i64: 1, 1, 128>}, {transform_indices = @transform_2, window_bounds = array<i64: 1, 2, 128>}, {transform_indices = @transform_3, window_bounds = array<i64: 1, 2, 128>}]} {
    %c0 = arith.constant 0 : index
    %c0_0 = arith.constant 0 : index
    %c0_1 = arith.constant 0 : index
    %0 = vector.load %arg4[%c0, %c0_0, %c0_1] : memref<1x2x128xf32, #tpu.memory_space<vmem>>, vector<1x2x128xf32>
    %1 = vector.shape_cast %0 : vector<1x2x128xf32> to vector<2x128xf32>
    %c0_2 = arith.constant 0 : index
    %c0_3 = arith.constant 0 : index
    %c0_4 = arith.constant 0 : index
    %2 = vector.load %arg2[%c0_2, %c0_3, %c0_4] : memref<1x1x128xf32, #tpu.memory_space<vmem>>, vector<1x1x128xf32>
    %3 = vector.shape_cast %2 : vector<1x1x128xf32> to vector<1x128xf32>
    %4 = vector.broadcast %3 : vector<1x128xf32> to vector<2x128xf32>
    %5 = arith.mulf %1, %4 : vector<2x128xf32>
    %c0_5 = arith.constant 0 : index
    %c0_6 = arith.constant 0 : index
    %c0_7 = arith.constant 0 : index
    %6 = vector.load %arg3[%c0_5, %c0_6, %c0_7] : memref<1x1x128xf32, #tpu.memory_space<vmem>>, vector<1x1x128xf32>
    %7 = vector.shape_cast %6 : vector<1x1x128xf32> to vector<1x128xf32>
    %8 = vector.broadcast %7 : vector<1x128xf32> to vector<2x128xf32>
    %9 = arith.addf %5, %8 : vector<2x128xf32>
    %c0_8 = arith.constant 0 : index
    %c0_9 = arith.constant 0 : index
    %c0_10 = arith.constant 0 : index
    %10 = vector.load %arg5[%c0_8, %c0_9, %c0_10] : memref<1x2x128xf32, #tpu.memory_space<vmem>>, vector<1x2x128xf32>
    %11 = vector.shape_cast %10 : vector<1x2x128xf32> to vector<2x128xf32>
    %12 = vector.shape_cast %9 : vector<2x128xf32> to vector<1x2x128xf32>
    tpu.vector_store %arg5[%c0_8, %c0_9, %c0_10], %12 {strides = array<i32>} : memref<1x2x128xf32, #tpu.memory_space<vmem>>, vector<1x2x128xf32>,
    return
  }
  func.func @transform_0(%arg0: i32, %arg1: i32) -> (i32, i32, i32) {
    %c0_i32 = arith.constant 0 : i32
    %c0_i32_0 = arith.constant 0 : i32
    %c0_i32_1 = arith.constant 0 : i32
    return %arg0, %c0_i32, %c0_i32_0 : i32, i32, i32
  }
  func.func @transform_1(%arg0: i32, %arg1: i32) -> (i32, i32, i32) {
    %c0_i32 = arith.constant 0 : i32
    %c0_i32_0 = arith.constant 0 : i32
    %c0_i32_1 = arith.constant 0 : i32
    return %arg0, %c0_i32, %c0_i32_0 : i32, i32, i32
  }
  func.func @transform_2(%arg0: i32, %arg1: i32) -> (i32, i32, i32) {
    %c0_i32 = arith.constant 0 : i32
    %c0_i32_0 = arith.constant 0 : i32
    return %arg0, %arg1, %c0_i32 : i32, i32, i32
  }
  func.func @transform_3(%arg0: i32, %arg1: i32) -> (i32, i32, i32) {
    %c0_i32 = arith.constant 0 : i32
    %c0_i32_0 = arith.constant 0 : i32
    return %arg0, %arg1, %c0_i32 : i32, i32, i32
  }
}

</mosaic_0001>

<llo_original>
// kernel: tpu_custom_call.1
$region0: #{tpu_custom_call.1}
  #allocation0 [shape = 'u32[]', space=smem, size = 0x4, offset = 0x4, fixed_abs, tag = 'smem constant byte address 0x4 - core index']
  #allocation1 [shape = 'u32[144,128]{1,0:T(1,128)}', space=vmem, size = 0x12000, scoped, tag = 'internal scratch']
  %s0 = inlined_call_operand.hbm [shape: f32[2,1,128], index: 0, kind: input, shape index: {}]
  %s1 = inlined_call_operand.vmem [shape: f32[2,1,128], index: 1, kind: input, shape index: {}]
  %s2 = inlined_call_operand.vmem [shape: f32[2,2,128], index: 2, kind: input, shape index: {}]
  %s3 = inlined_call_operand.hbm [shape: f32[2,2,128], index: 3, kind: output, shape index: {}]
  %s4 = sld [smem:[#allocation0]]
  $region49: #{tpu_custom_call.1} parent=0
    _
  %s6 = ssub.s32 1, %s4
  %s7 = scalar_select 0, %s6, %s4
  $region1: #{tpu_custom_call.1} parent=0
    #allocation2 [shape = 'u8[1024]{0}', space=vmem, size = 0x400, scoped, tag = 'input window, operand 0']
    #allocation3 [shape = 's32[2]{0}', space=sflag, size = 0x8, scoped, tag = 'scoped memory for tpu_custom_call.1']
    #allocation4 [shape = 's32[2]{0}', space=sflag, size = 0x8, scoped, tag = 'scoped memory for tpu_custom_call.1']
    #allocation5 [shape = 'u8[2048]{0}', space=vmem, size = 0x800, scoped, tag = 'output window, operand 0']
    %8 = vsyncpa [#allocation3], 0
    %s9 = scalar_lea.sflag [#allocation3], 1
    %10 = vsyncpa %s9, 0
    %11 = vsyncpa [#allocation4], 0
    %s12 = scalar_lea.sflag [#allocation4], 1
    %13 = vsyncpa %s12, 0
    loop: start=0, step=1, limit=4
    $region2: #{tpu_custom_call.1} parent=1 // loop_pre_header
      _
    $region3: #{tpu_custom_call.1} parent=1 // loop_header
      %s15 = sphi 0, %s19
      %p16 = scmp.ge.s32.totalorder %s15, 4
      %s22 = sphi 0, %s34
      %s23 = sphi 0, %s30
      %s24 = sphi 0, %s22
      %s25 = sphi 0, %s23
      %s26 = sphi 0, %s24
      %s27 = sphi 0, %s25
      %s37 = sphi 0, %s39
      %s40 = sphi 0, %s37
      %s41 = sphi 0, %s40
      %s57 = sphi 0, %s41
      %s63 = sphi 0, %s65
      %s66 = sphi 0, %s63
      %s67 = sphi 0, %s66
      %s83 = sphi 0, %s67
      %s91 = sphi 0, %s93
      %s94 = sphi 0, %s91
      %s95 = sphi 0, %s94
      %s111 = sphi 0, %s95
      %s119 = sphi 0, %s121
      %s122 = sphi 0, %s119
      %s123 = sphi 0, %s122
      %s139 = sphi 0, %s123
    $region4: #{tpu_custom_call.1} parent=1 // loop_header_branch
      %18 = sbr.rel (%p16) target = $region8
    $region5: #{tpu_custom_call.1} parent=1 // loop_body
      %s20 = ssub.s32 %s15, 1
      %s21 = ssub.s32 %s15, 2
      %s28 = sadd.s32 1, %s23
      %p29 = scmp.ge.s32.totalorder %s28, 1
      %s30 = scalar_select %p29, 0, %s28
      %s31 = sadd.s32 1, %s22
      %s32 = scalar_select %p29, %s31, %s22
      %p33 = scmp.ge.s32.totalorder %s32, 2
      %s34 = scalar_select %p33, 0, %s32
      %s35 = ssub.s32 %s22, %s34
      %p36 = scmp.eq.s32.totalorder %s35, 0
      %s38 = sadd.s32 %s37, 1
      %s39 = scalar_select %p36, %s37, %s38
      %p42 = pneg %p36
      %p43 = scmp.eq.s32.totalorder %s15, 1
      %p44 = por %p42, %p43
      %p45 = scmp.ne.s32.totalorder %s37, %s40
      %p46 = scmp.eq.s32.totalorder %s15, 0
      %p47 = por %p45, %p46
      %p48 = scmp.ne.s32.totalorder %s37, %s40
      %p49 = scmp.eq.s32.totalorder %s20, 1
      %p50 = por %p48, %p49
      %p51 = scmp.ne.s32.totalorder %s40, %s41
      %p52 = scmp.eq.s32.totalorder %s20, 0
      %p53 = por %p51, %p52
      %p54 = scmp.ne.s32.totalorder %s40, %s41
      %p55 = scmp.eq.s32.totalorder %s21, 1
      %p56 = por %p54, %p55
      %p58 = scmp.ne.s32.totalorder %s41, %s57
      %p59 = scmp.eq.s32.totalorder %s21, 0
      %p60 = por %p58, %p59
      %s61 = ssub.s32 %s22, %s34
      %p62 = scmp.eq.s32.totalorder %s61, 0
      %s64 = sadd.s32 %s63, 1
      %s65 = scalar_select %p62, %s63, %s64
      %p68 = pneg %p62
      %p69 = scmp.eq.s32.totalorder %s15, 1
      %p70 = por %p68, %p69
      %p71 = scmp.ne.s32.totalorder %s63, %s66
      %p72 = scmp.eq.s32.totalorder %s15, 0
      %p73 = por %p71, %p72
      %p74 = scmp.ne.s32.totalorder %s63, %s66
      %p75 = scmp.eq.s32.totalorder %s20, 1
      %p76 = por %p74, %p75
      %p77 = scmp.ne.s32.totalorder %s66, %s67
      %p78 = scmp.eq.s32.totalorder %s20, 0
      %p79 = por %p77, %p78
      %p80 = scmp.ne.s32.totalorder %s66, %s67
      %p81 = scmp.eq.s32.totalorder %s21, 1
      %p82 = por %p80, %p81
      %p84 = scmp.ne.s32.totalorder %s67, %s83
      %p85 = scmp.eq.s32.totalorder %s21, 0
      %p86 = por %p84, %p85
      %s87 = ssub.s32 %s22, %s34
      %s88 = ssub.s32 %s23, %s30
      %s89 = sor.u32 %s87, %s88
      %p90 = scmp.eq.s32.totalorder %s89, 0
      %s92 = sadd.s32 %s91, 1
      %s93 = scalar_select %p90, %s91, %s92
      %p96 = pneg %p90
      %p97 = scmp.eq.s32.totalorder %s15, 1
      %p98 = por %p96, %p97
      %p99 = scmp.ne.s32.totalorder %s91, %s94
      %p100 = scmp.eq.s32.totalorder %s15, 0
      %p101 = por %p99, %p100
      %p102 = scmp.ne.s32.totalorder %s91, %s94
      %p103 = scmp.eq.s32.totalorder %s20, 1
      %p104 = por %p102, %p103
      %p105 = scmp.ne.s32.totalorder %s94, %s95
      %p106 = scmp.eq.s32.totalorder %s20, 0
      %p107 = por %p105, %p106
      %p108 = scmp.ne.s32.totalorder %s94, %s95
      %p109 = scmp.eq.s32.totalorder %s21, 1
      %p110 = por %p108, %p109
      %p112 = scmp.ne.s32.totalorder %s95, %s111
      %p113 = scmp.eq.s32.totalorder %s21, 0
      %p114 = por %p112, %p113
      %s115 = ssub.s32 %s22, %s34
      %s116 = ssub.s32 %s23, %s30
      %s117 = sor.u32 %s115, %s116
      %p118 = scmp.eq.s32.totalorder %s117, 0
      %s120 = sadd.s32 %s119, 1
      %s121 = scalar_select %p118, %s119, %s120
      %p124 = pneg %p118
      %p125 = scmp.eq.s32.totalorder %s15, 1
      %p126 = por %p124, %p125
      %p127 = scmp.ne.s32.totalorder %s119, %s122
      %p128 = scmp.eq.s32.totalorder %s15, 0
      %p129 = por %p127, %p128
      %p130 = scmp.ne.s32.totalorder %s119, %s122
      %p131 = scmp.eq.s32.totalorder %s20, 1
      %p132 = por %p130, %p131
      %p133 = scmp.ne.s32.totalorder %s122, %s123
      %p134 = scmp.eq.s32.totalorder %s20, 0
      %p135 = por %p133, %p134
      %p136 = scmp.ne.s32.totalorder %s122, %s123
      %p137 = scmp.eq.s32.totalorder %s21, 1
      %p138 = por %p136, %p137
      %p140 = scmp.ne.s32.totalorder %s123, %s139
      %p141 = scmp.eq.s32.totalorder %s21, 0
      %p142 = por %p140, %p141
      %p143 = scmp.le.s32.totalorder 1, %s15
      %p144 = scmp.lt.s32.totalorder %s15, 3
      %p145 = pnand %p143, %p144
      %p146 = pneg %p145
      // Predicated region
      $region9: #{tpu_custom_call.1} parent=5 // pred_check
        _
      $region10: #{tpu_custom_call.1} parent=5 // pred_check_branch
        %148 = sbr.rel (%p145) target = $region12
      $region11: #{tpu_custom_call.1} parent=5 // pred_region
        %s149 = ssub.s32 %s15, 1
      $region12: #{tpu_custom_call.1} parent=5 // pred_fallthru
        _
      %p150 = scmp.lt.s32.totalorder %s15, 2
      // Predicated region
      $region13: #{tpu_custom_call.1} parent=5 // pred_check
        %p151 = pneg %p150
      $region14: #{tpu_custom_call.1} parent=5 // pred_check_branch
        %153 = sbr.rel (%p151) target = $region16
      $region15: #{tpu_custom_call.1} parent=5 // pred_region
        // Predicated region
        $region17: #{tpu_custom_call.1} parent=15 // pred_check
          %p154 = pneg %p47
        $region18: #{tpu_custom_call.1} parent=15 // pred_check_branch
          %156 = sbr.rel (%p154) target = $region20
        $region19: #{tpu_custom_call.1} parent=15 // pred_region
          %s157 = sand.u32 %s37, 1
          %s158 = scalar_lea.sflag [#allocation3], %s157
          %s159 = sand.u32 %s37, 1
          %s160 = scalar_lea.vmem [#allocation2], %s159
          %s162 = ssub.s32 16, 16
          %163 = vsyncadd %s158, %s162
          %s164 = smul.addr %s22, 16
          %s165 = scalar_lea.hbm %s0, %s164
          %s167 = sshll.u32 %s160, 4
          %s168 = int_to_ptr.vmem [resolvable:$true] %s167
          %170 = dma.hbm_to_vmem [thread:$0]  %s165, 16, %s168, %s158
        $region20: #{tpu_custom_call.1} parent=15 // pred_fallthru
          _
        // Predicated region
        $region21: #{tpu_custom_call.1} parent=15 // pred_check
          %p171 = pneg %p73
        $region22: #{tpu_custom_call.1} parent=15 // pred_check_branch
          %173 = sbr.rel (%p171) target = $region24
        $region23: #{tpu_custom_call.1} parent=15 // pred_region
          %p174 = scmp.lt.s32.totalorder %s22, 1
          %s175 = scalar_select %p174, %s22, 1
          %s176 = scalar_lea.vmem %s1, %s175
        $region24: #{tpu_custom_call.1} parent=15 // pred_fallthru
          _
        // Predicated region
        $region25: #{tpu_custom_call.1} parent=15 // pred_check
          %p177 = pneg %p101
        $region26: #{tpu_custom_call.1} parent=15 // pred_check_branch
          %179 = sbr.rel (%p177) target = $region28
        $region27: #{tpu_custom_call.1} parent=15 // pred_region
          %p180 = scmp.lt.s32.totalorder %s22, 1
          %s181 = scalar_select %p180, %s22, 1
          %p182 = scmp.lt.s32.totalorder %s23, 0
          %s183 = scalar_select %p182, %s23, 0
          %s184 = sadd.s32 %s183, %s181
          %s185 = smul.addr %s184, 2
          %s186 = scalar_lea.vmem %s2, %s185
        $region28: #{tpu_custom_call.1} parent=15 // pred_fallthru
          _
      $region16: #{tpu_custom_call.1} parent=5 // pred_fallthru
        _
      %p187 = scmp.le.s32.totalorder 1, %s15
      %p188 = scmp.lt.s32.totalorder %s15, 3
      %p189 = pnand %p187, %p188
      %p190 = pneg %p189
      // Predicated region
      $region29: #{tpu_custom_call.1} parent=5 // pred_check
        _
      $region30: #{tpu_custom_call.1} parent=5 // pred_check_branch
        %192 = sbr.rel (%p189) target = $region32
      $region31: #{tpu_custom_call.1} parent=5 // pred_region
        %s193 = ssub.s32 %s15, 1
        %s194 = sand.u32 %s40, 1
        %s195 = scalar_lea.sflag [#allocation3], %s194
        %s196 = sand.u32 %s40, 1
        %s197 = scalar_lea.vmem [#allocation2], %s196
        // Predicated region
        $region33: #{tpu_custom_call.1} parent=31 // pred_check
          %p198 = pneg %p53
        $region34: #{tpu_custom_call.1} parent=31 // pred_check_branch
          %200 = sbr.rel (%p198) target = $region36
        $region35: #{tpu_custom_call.1} parent=31 // pred_region
          %201 = dma.done %s195, 16
        $region36: #{tpu_custom_call.1} parent=31 // pred_fallthru
          _
        %s202 = sand.u32 %s40, 1
        %s203 = scalar_lea.sflag [#allocation3], %s202
        %s204 = sand.u32 %s40, 1
        %s205 = scalar_lea.vmem [#allocation2], %s204
        %p206 = pneg %p53
        %p207 = pneg %p50
        %p208 = scmp.lt.s32.totalorder %s24, 1
        %s209 = scalar_select %p208, %s24, 1
        %s210 = scalar_lea.vmem %s1, %s209
        %p211 = pneg %p79
        %p212 = pneg %p76
        %p213 = scmp.lt.s32.totalorder %s24, 1
        %s214 = scalar_select %p213, %s24, 1
        %p215 = scmp.lt.s32.totalorder %s25, 0
        %s216 = scalar_select %p215, %s25, 0
        %s217 = sadd.s32 %s216, %s214
        %s218 = smul.addr %s217, 2
        %s219 = scalar_lea.vmem %s2, %s218
        %p220 = pneg %p107
        %p221 = pneg %p104
        %p222 = pneg %p135
        %p223 = pneg %p132
        %s224 = sand.u32 %s122, 1
        %s225 = scalar_lea.sflag [#allocation4], %s224
        %s226 = sand.u32 %s122, 1
        %s227 = smul.addr %s226, 2
        %s228 = scalar_lea.vmem [#allocation5], %s227
        %p229 = scmp.lt.s32.totalorder %s24, 1
        %s230 = scalar_select %p229, %s24, 1
        %s231 = scalar_lea.vmem %s1, %s230
        %p232 = scmp.lt.s32.totalorder %s24, 1
        %s233 = scalar_select %p232, %s24, 1
        %p234 = scmp.lt.s32.totalorder %s25, 0
        %s235 = scalar_select %p234, %s25, 0
        %s236 = sadd.s32 %s235, %s233
        %s237 = smul.addr %s236, 2
        %s238 = scalar_lea.vmem %s2, %s237
        %v239 = vld [vmem:[%s238] sm:$0x3]
        %v240 = vld [vmem:[%s197] sm:$0x1]
        %v242 = vlaneseq
        %v243 = vshrl.u32 %v242, 7
        %v244 = vsub.s32 0, %v243
        %v245 = vrot.slane %v240, %v244
        %v247 = vmul.f32 %v239, %v245
        %v248 = vld [vmem:[%s231] sm:$0x1]
        %v250 = vlaneseq
        %v251 = vshrl.u32 %v250, 7
        %v252 = vsub.s32 0, %v251
        %v253 = vrot.slane %v248, %v252
        %v255 = vadd.f32 %v247, %v253
        %256 = vst [vmem:[%s228] sm:$0x3] %v255
        %s257 = sand.u32 %s122, 1
        %s258 = scalar_lea.sflag [#allocation4], %s257
        %s259 = sand.u32 %s122, 1
        %s260 = smul.addr %s259, 2
        %s261 = scalar_lea.vmem [#allocation5], %s260
        // Predicated region
        $region37: #{tpu_custom_call.1} parent=31 // pred_check
          %p262 = pneg %p132
        $region38: #{tpu_custom_call.1} parent=31 // pred_check_branch
          %264 = sbr.rel (%p262) target = $region40
        $region39: #{tpu_custom_call.1} parent=31 // pred_region
          %s266 = ssub.s32 32, 32
          %267 = vsyncadd %s258, %s266
          %s268 = sadd.s32 %s25, %s24
          %s269 = smul.addr %s268, 32
          %s270 = scalar_lea.hbm %s3, %s269
          %s272 = sshll.u32 %s261, 4
          %s273 = int_to_ptr.vmem [resolvable:$true] %s272
          %275 = dma.vmem_to_hbm [thread:$0]  %s273, 32, %s270, %s258
        $region40: #{tpu_custom_call.1} parent=31 // pred_fallthru
          _
      $region32: #{tpu_custom_call.1} parent=5 // pred_fallthru
        _
      %p276 = scmp.le.s32.totalorder 2, %s15
      // Predicated region
      $region41: #{tpu_custom_call.1} parent=5 // pred_check
        %p277 = pneg %p276
      $region42: #{tpu_custom_call.1} parent=5 // pred_check_branch
        %279 = sbr.rel (%p277) target = $region44
      $region43: #{tpu_custom_call.1} parent=5 // pred_region
        %s280 = ssub.s32 %s15, 2
        // Predicated region
        $region45: #{tpu_custom_call.1} parent=43 // pred_check
          %p281 = pneg %p138
        $region46: #{tpu_custom_call.1} parent=43 // pred_check_branch
          %283 = sbr.rel (%p281) target = $region48
        $region47: #{tpu_custom_call.1} parent=43 // pred_region
          %s284 = sand.u32 %s123, 1
          %s285 = scalar_lea.sflag [#allocation4], %s284
          %s286 = sand.u32 %s123, 1
          %s287 = smul.addr %s286, 2
          %s288 = scalar_lea.vmem [#allocation5], %s287
          %289 = dma.done %s285, 32
        $region48: #{tpu_custom_call.1} parent=43 // pred_fallthru
          _
      $region44: #{tpu_custom_call.1} parent=5 // pred_fallthru
        _
    $region6: #{tpu_custom_call.1} parent=1 // loop_footer
      %s19 = sadd.s32 1, %s15
    $region7: #{tpu_custom_call.1} parent=1 // loop_footer_branch
      %14 = sbr.rel target = $region3
    $region8: #{tpu_custom_call.1} parent=1 // loop_exit
      _
    %290 = vsyncpa [#allocation3], 1
    %s291 = scalar_lea.sflag [#allocation3], 1
    %292 = vsyncpa %s291, 1
    %293 = vsyncpa [#allocation4], 1
    %s294 = scalar_lea.sflag [#allocation4], 1
    %295 = vsyncpa %s294, 1

</llo_original>
